<compile_context>
chip_gen: v7x
topology: tpu7x:2x2x1
jax: 0.10.0
libtpu: 0.0.40
codegen_flags: <defaults>
</compile_context>

<pallas_src>
import functools
from typing import NamedTuple

import jax
import jax.numpy as jnp
from jax.experimental import pallas as pl
from jax.experimental.pallas import tpu as pltpu


# --------------------------------------------------------------------------- #
# helpers
# --------------------------------------------------------------------------- #
def _round_up(x, m):
    return ((x + m - 1) // m) * m


def _pick_tile(dim_pad, max_tile, min_tiles=1):
    """Largest multiple of 128 dividing dim_pad, <= max_tile, preferring >= min_tiles tiles."""
    cands = [t for t in range(128, min(max_tile, dim_pad) + 1, 128) if dim_pad % t == 0]
    pref = [t for t in cands if dim_pad // t >= min_tiles]
    return max(pref if pref else cands)


def _vmem_limit(working_bytes):
    """Scoped VMEM request: enough for the working set, leaving headroom below physical."""
    try:
        phys = int(pltpu.get_tpu_info().vmem_capacity_bytes)
    except Exception:  # pragma: no cover - conservative fallback (v7x-sized)
        phys = 64 << 20
    cap = max(phys - (16 << 20), 16 << 20)       # headroom for compiler scratch/semaphores
    return int(min(max(2 * working_bytes + (2 << 20), 16 << 20), cap))


# --------------------------------------------------------------------------- #
# kernels
# --------------------------------------------------------------------------- #
def _proj_single_block_kernel(x_ref, w_ref, b_ref, o_ref):
    """Grid-less fast path: one branch per grid step, whole problem in one block.

    x_ref: (1, M, K)  w_ref: (1, K, N)  b_ref: (1, 1, N) f32  o_ref: (1, M, N)
    """
    acc = jnp.dot(x_ref[0], w_ref[0], preferred_element_type=jnp.float32)
    o_ref[0] = jnp.maximum(acc + b_ref[0], 0.0).astype(o_ref.dtype)


def _proj_tiled_kernel_f32_out(x_ref, w_ref, b_ref, o_ref):
    """K-tiled path, f32 output: accumulate directly into the resident output block.

    blocks: x (1,bm,bk)  w (1,bk,bn)  b (1,1,bn)  o (1,bm,bn) f32 (resident across k)
    """
    k = pl.program_id(3)

    @pl.when(k == 0)
    def _init():
        o_ref[0] = jnp.zeros(o_ref.shape[1:], o_ref.dtype)

    o_ref[0] += jnp.dot(x_ref[0], w_ref[0], preferred_element_type=jnp.float32)

    @pl.when(k == pl.num_programs(3) - 1)
    def _epilogue():
        o_ref[0] = jnp.maximum(o_ref[0] + b_ref[0], 0.0)


def _proj_tiled_kernel_acc(x_ref, w_ref, b_ref, o_ref, acc_ref):
    """K-tiled path, non-f32 output: f32 VMEM accumulator, cast in the epilogue."""
    k = pl.program_id(3)

    @pl.when(k == 0)
    def _init():
        acc_ref[...] = jnp.zeros_like(acc_ref)

    acc_ref[...] += jnp.dot(x_ref[0], w_ref[0], preferred_element_type=jnp.float32)

    @pl.when(k == pl.num_programs(3) - 1)
    def _epilogue():
        o_ref[0] = jnp.maximum(acc_ref[...] + b_ref[0], 0.0).astype(o_ref.dtype)


# --------------------------------------------------------------------------- #
# dispatch wrapper
# --------------------------------------------------------------------------- #
_FAST_PATH_VMEM_BYTES = 8 << 20   # single-block fast path if working set fits here


@functools.partial(jax.jit, static_argnames=("n_true",))
def _stacked_projection(xs, w, b, *, n_true):
    """relu(xs[s] @ w[s] + b[s]) for every branch s.

    xs: (S, M, K)           activations
    w : (S, K_pad, N_pad)   pre-padded / pre-cast weights (see prepare_*_params)
    b : (S, 1, N_pad)       float32 bias
    returns (S, M, n_true) in xs.dtype.
    """
    S, M, K = xs.shape
    Sw, k_pad, n_pad = w.shape
    assert Sw == S and K <= k_pad and n_true <= n_pad

    out_dtype = xs.dtype
    compute_dtype = w.dtype                      # activations cast to the weight dtype
    xb = jnp.dtype(compute_dtype).itemsize
    ob = jnp.dtype(out_dtype).itemsize
    pack = max(8, 32 // max(xb, 1))              # sublane pack: 8 f32, 16 bf16, 32 int8/fp8

    m_small = _round_up(M, pack)
    fast_working = 2 * (m_small * k_pad * xb + k_pad * n_pad * xb
                        + n_pad * 4 + m_small * n_pad * ob)
    use_fast = fast_working <= _FAST_PATH_VMEM_BYTES

    # ---------------- fast path: single block per branch ---------------- #
    if use_fast:
        m_pad = m_small
        xs_p = xs.astype(compute_dtype)
        if m_pad != M or k_pad != K:
            xs_p = jnp.pad(xs_p, ((0, 0), (0, m_pad - M), (0, k_pad - K)))

        cost = pl.CostEstimate(
            flops=2 * S * m_pad * k_pad * n_pad,
            transcendentals=0,
            bytes_accessed=S * (m_pad * k_pad * xb + k_pad * n_pad * xb
                                + n_pad * 4 + m_pad * n_pad * ob),
        )
        out_p = pl.pallas_call(
            _proj_single_block_kernel,
            out_shape=jax.ShapeDtypeStruct((S, m_pad, n_pad), out_dtype),
            grid_spec=pltpu.PrefetchScalarGridSpec(
                num_scalar_prefetch=0,
                grid=(S,),
                in_specs=[
                    pl.BlockSpec((1, m_pad, k_pad), lambda s: (s, 0, 0)),
                    pl.BlockSpec((1, k_pad, n_pad), lambda s: (s, 0, 0)),
                    pl.BlockSpec((1, 1, n_pad), lambda s: (s, 0, 0)),
                ],
                out_specs=pl.BlockSpec((1, m_pad, n_pad), lambda s: (s, 0, 0)),
            ),
            compiler_params=pltpu.CompilerParams(
                dimension_semantics=("parallel",),
                vmem_limit_bytes=_vmem_limit(fast_working),
            ),
            cost_estimate=cost,
        )(xs_p, w, b)
        return out_p[:, :M, :n_true]

    # ---------------- tiled path: (S, M, N, K) grid ---------------------- #
    bm = min(_round_up(M, pack), 512)            # single M tile for small batches
    bk = _pick_tile(k_pad, 1024 if xb <= 2 else 512)
    bn = _pick_tile(n_pad, 512, min_tiles=2)     # >= 2 N tiles keeps both v7x TCs busy
    m_pad = _round_up(M, bm)

    xs_p = xs.astype(compute_dtype)
    if m_pad != M or k_pad != K:
        xs_p = jnp.pad(xs_p, ((0, 0), (0, m_pad - M), (0, k_pad - K)))

    grid = (S, m_pad // bm, n_pad // bn, k_pad // bk)
    m_tiles, n_tiles = grid[1], grid[2]

    use_scratch = out_dtype != jnp.float32
    kernel = _proj_tiled_kernel_acc if use_scratch else _proj_tiled_kernel_f32_out
    scratch = [pltpu.VMEM((bm, bn), jnp.float32)] if use_scratch else []

    vmem_est = (2 * bm * bk * xb + 2 * bk * bn * xb + 2 * bn * 4
                + 2 * bm * bn * ob + (bm * bn * 4 if use_scratch else 0))
    cost = pl.CostEstimate(
        flops=2 * S * m_pad * k_pad * n_pad,
        transcendentals=0,
        bytes_accessed=S * (m_pad * k_pad * xb * n_tiles       # x re-read per N tile
                            + k_pad * n_pad * xb * m_tiles     # w re-read per M tile
                            + n_pad * 4 * m_tiles
                            + m_pad * n_pad * ob),
    )

    out_p = pl.pallas_call(
        kernel,
        out_shape=jax.ShapeDtypeStruct((S, m_pad, n_pad), out_dtype),
        grid_spec=pltpu.PrefetchScalarGridSpec(
            num_scalar_prefetch=0,
            grid=grid,
            in_specs=[
                pl.BlockSpec((1, bm, bk), lambda s, i, j, k: (s, i, k)),
                pl.BlockSpec((1, bk, bn), lambda s, i, j, k: (s, k, j)),
                pl.BlockSpec((1, 1, bn), lambda s, i, j, k: (s, 0, j)),
            ],
            out_specs=pl.BlockSpec((1, bm, bn), lambda s, i, j, k: (s, i, j)),
            scratch_shapes=scratch,
        ),
        compiler_params=pltpu.CompilerParams(
            dimension_semantics=("parallel", "parallel", "parallel", "arbitrary"),
            vmem_limit_bytes=_vmem_limit(vmem_est),
        ),
        cost_estimate=cost,
    )(xs_p, w, b)
    return out_p[:, :M, :n_true]


# --------------------------------------------------------------------------- #
# parameter preparation (one-time: transpose, pad, cast -> no per-call traffic)
# --------------------------------------------------------------------------- #
class ProjectionParams(NamedTuple):
    w: jax.Array            # (S, K_pad, N_pad), weight_dtype (default bf16)
    b: jax.Array            # (S, 1, N_pad), float32
    in_features: int
    out_features: int


def prepare_projection_params(W, b, *, weight_dtype=jnp.bfloat16):
    """W: (out_features, in_features) as in nn.Linear; b: (out_features,)."""
    W = jnp.asarray(W)
    b = jnp.asarray(b)
    N, K = W.shape
    k_pad = _round_up(K, 128)
    n_pad = _round_up(N, 128)
    w_t = jnp.pad(W.T.astype(weight_dtype), ((0, k_pad - K), (0, n_pad - N)))[None]
    b_p = jnp.pad(b.astype(jnp.float32), (0, n_pad - N)).reshape(1, 1, n_pad)
    return ProjectionParams(w=w_t, b=b_p, in_features=K, out_features=N)


def prepare_alignment_params(Wi, bi, Wt, bt, *, weight_dtype=jnp.bfloat16):
    """Stack the image- and text-adapter weights once so both heads run in one call."""
    pi = prepare_projection_params(Wi, bi, weight_dtype=weight_dtype)
    pt = prepare_projection_params(Wt, bt, weight_dtype=weight_dtype)
    assert pi.w.shape == pt.w.shape and pi.in_features == pt.in_features
    return ProjectionParams(
        w=jnp.concatenate([pi.w, pt.w], axis=0),
        b=jnp.concatenate([pi.b, pt.b], axis=0),
        in_features=pi.in_features,
        out_features=pi.out_features,
    )


def make_projection_weights(key, in_features, out_features):
    """Deterministic init mimicking nn.Linear: W (out, in), b (out,)."""
    kw, kb = jax.random.split(key)
    bound = 1.0 / (in_features ** 0.5)
    W = jax.random.uniform(kw, (out_features, in_features), jnp.float32, -bound, bound)
    b = jax.random.uniform(kb, (out_features,), jnp.float32, -bound, bound)
    return W, b


# --------------------------------------------------------------------------- #
# forward passes
# --------------------------------------------------------------------------- #
def projection_forward(x, params: ProjectionParams):
    """relu(x @ W.T + b) for a single branch.  x: (M, in_features)."""
    assert params.w.shape[0] == 1
    return _stacked_projection(x[None], params.w, params.b, n_true=params.out_features)[0]


def symptom_image_text_alignment_forward(image_feats, text_feats, params: ProjectionParams):
    """Mirror of SymptomImageTextAlignmentModel.forward: returns (image_features,
    text_features) produced by the fused adapter/projection heads.
    """
    # TODO(synk): med_vis_extractor, clip_model.visual and the text tokenizer are
    # external black-box modules in the reference model; image_feats/text_feats are
    # their outputs and only the adapter projection heads run as Pallas kernels here.
    assert params.w.shape[0] == 2 and image_feats.shape == text_feats.shape
    xs = jnp.stack([image_feats, text_feats])            # (2, M, K), cheap activation stack
    out = _stacked_projection(xs, params.w, params.b, n_true=params.out_features)
    return out[0], out[1]


# --------------------------------------------------------------------------- #
# self-test
# --------------------------------------------------------------------------- #
if __name__ == "__main__":
    key = jax.random.PRNGKey(0)
    hidden_dim, input_dim, out_dim = 4, 4, 32
    batch = 8
    in_features = hidden_dim * input_dim ** 2            # 64

    kx, kt, kpi, kpt, kbig = jax.random.split(key, 5)
    image_feats = jax.random.normal(kx, (batch, in_features), jnp.float32)
    text_feats = jax.random.normal(kt, (batch, in_features), jnp.float32)
    Wi, bi = make_projection_weights(kpi, in_features, out_dim)
    Wt, bt = make_projection_weights(kpt, in_features, out_dim)

    def ref_bf16(x, W, b):
        xq = x.astype(jnp.bfloat16).astype(jnp.float32)
        wq = W.astype(jnp.bfloat16).astype(jnp.float32)
        return jnp.maximum(xq @ wq.T + b, 0.0)

    # ---- fused bf16-weight default path (both adapter heads in one pallas_call) ----
    fused = prepare_alignment_params(Wi, bi, Wt, bt)      # bf16 weights, padded once
    img_out, txt_out = symptom_image_text_alignment_forward(image_feats, text_feats, fused)
    jax.block_until_ready((img_out, txt_out))
    assert img_out.shape == (batch, out_dim) and txt_out.shape == (batch, out_dim)
    assert jnp.allclose(img_out, ref_bf16(image_feats, Wi, bi), atol=1e-2, rtol=1e-2), \
        "fused image branch mismatch"
    assert jnp.allclose(txt_out, ref_bf16(text_feats, Wt, bt), atol=1e-2, rtol=1e-2), \
        "fused text branch mismatch"

    # ---- f32-weight single-branch path (tight tolerance) + ragged batch ----
    p_f32 = prepare_projection_params(Wi, bi, weight_dtype=jnp.float32)
    y_f32 = projection_forward(image_feats, p_f32)
    x_odd = jax.random.normal(kx, (10, in_features), jnp.float32)
    y_odd = projection_forward(x_odd, p_f32)
    jax.block_until_ready((y_f32, y_odd))
    assert jnp.allclose(y_f32, jnp.maximum(image_feats @ Wi.T + bi, 0.0),
                        atol=1e-5, rtol=1e-5), "f32 path mismatch"
    assert jnp.allclose(y_odd, jnp.maximum(x_odd @ Wi.T + bi, 0.0),
                        atol=1e-5, rtol=1e-5), "ragged-batch mismatch"

    # ---- larger CLIP-adapter-like shapes exercise the K/N-tiled (4-D grid) path ----
    K_big, N_big, M_big = 4096, 1024, 8
    kwb, kxb = jax.random.split(kbig)
    W_big, b_big = make_projection_weights(kwb, K_big, N_big)
    x_big = jax.random.normal(kxb, (M_big, K_big), jnp.float32)
    p_big = prepare_projection_params(W_big, b_big)       # bf16 weights -> tiled path
    y_big = projection_forward(x_big, p_big)
    jax.block_until_ready(y_big)
    assert y_big.shape == (M_big, N_big)
    assert jnp.allclose(y_big, ref_bf16(x_big, W_big, b_big), atol=2e-2, rtol=2e-2), \
        "tiled-path mismatch"

    print("KERNEL_OK")
</pallas_src>

<mosaic_0001>
module attributes {stable_mosaic.version = 11 : i64} {
  func.func @_proj_single_block_kernel(%arg0: i32, %arg1: memref<1x16x128xbf16, #tpu.memory_space<vmem>>, %arg2: memref<1x128x128xbf16, #tpu.memory_space<vmem>>, %arg3: memref<1x1x128xf32, #tpu.memory_space<vmem>>, %arg4: memref<1x16x128xf32, #tpu.memory_space<vmem>>) attributes {dimension_semantics = [#tpu.dimension_semantics<parallel>], iteration_bounds = array<i64: 2>, scalar_prefetch = 0 : i64, scratch_operands = 0 : i64, tpu.core_type = #tpu.core_type<tc>, window_params = [{transform_indices = @transform_0, window_bounds = array<i64: 1, 16, 128>}, {transform_indices = @transform_1, window_bounds = array<i64: 1, 128, 128>}, {transform_indices = @transform_2, window_bounds = array<i64: 1, 1, 128>}, {transform_indices = @transform_3, window_bounds = array<i64: 1, 16, 128>}]} {
    %c0 = arith.constant 0 : index
    %c0_0 = arith.constant 0 : index
    %c0_1 = arith.constant 0 : index
    %0 = vector.load %arg1[%c0, %c0_0, %c0_1] : memref<1x16x128xbf16, #tpu.memory_space<vmem>>, vector<1x16x128xbf16>
    %1 = vector.shape_cast %0 : vector<1x16x128xbf16> to vector<16x128xbf16>
    %c0_2 = arith.constant 0 : index
    %c0_3 = arith.constant 0 : index
    %c0_4 = arith.constant 0 : index
    %2 = vector.load %arg2[%c0_2, %c0_3, %c0_4] : memref<1x128x128xbf16, #tpu.memory_space<vmem>>, vector<1x128x128xbf16>
    %3 = vector.shape_cast %2 : vector<1x128x128xbf16> to vector<128x128xbf16>
    %cst = arith.constant dense<0.000000e+00> : vector<16x128xf32>
    %4 = tpu.matmul %1, %3, %cst {dimension_numbers = #tpu.dot_dimension_numbers<[1], [0], [0], [1], [0, 0, 1, 1], [], []>} : vector<16x128xbf16>, vector<128x128xbf16>, vector<16x128xf32> -> vector<16x128xf32>
    %c0_5 = arith.constant 0 : index
    %c0_6 = arith.constant 0 : index
    %c0_7 = arith.constant 0 : index
    %5 = vector.load %arg3[%c0_5, %c0_6, %c0_7] : memref<1x1x128xf32, #tpu.memory_space<vmem>>, vector<1x1x128xf32>
    %6 = vector.shape_cast %5 : vector<1x1x128xf32> to vector<1x128xf32>
    %7 = vector.broadcast %6 : vector<1x128xf32> to vector<16x128xf32>
    %8 = arith.addf %4, %7 : vector<16x128xf32>
    %cst_8 = arith.constant 0.000000e+00 : f32
    %9 = vector.broadcast %cst_8 : f32 to vector<16x128xf32>
    %10 = arith.maximumf %8, %9 : vector<16x128xf32>
    %c0_9 = arith.constant 0 : index
    %c0_10 = arith.constant 0 : index
    %c0_11 = arith.constant 0 : index
    %11 = vector.load %arg4[%c0_9, %c0_10, %c0_11] : memref<1x16x128xf32, #tpu.memory_space<vmem>>, vector<1x16x128xf32>
    %12 = vector.shape_cast %11 : vector<1x16x128xf32> to vector<16x128xf32>
    %13 = vector.shape_cast %10 : vector<16x128xf32> to vector<1x16x128xf32>
    tpu.vector_store %arg4[%c0_9, %c0_10, %c0_11], %13 {strides = array<i32>} : memref<1x16x128xf32, #tpu.memory_space<vmem>>, vector<1x16x128xf32>,
    return
  }
  func.func @transform_0(%arg0: i32) -> (i32, i32, i32) {
    %c0_i32 = arith.constant 0 : i32
    %c0_i32_0 = arith.constant 0 : i32
    %c0_i32_1 = arith.constant 0 : i32
    return %arg0, %c0_i32, %c0_i32_0 : i32, i32, i32
  }
  func.func @transform_1(%arg0: i32) -> (i32, i32, i32) {
    %c0_i32 = arith.constant 0 : i32
    %c0_i32_0 = arith.constant 0 : i32
    %c0_i32_1 = arith.constant 0 : i32
    return %arg0, %c0_i32, %c0_i32_0 : i32, i32, i32
  }
  func.func @transform_2(%arg0: i32) -> (i32, i32, i32) {
    %c0_i32 = arith.constant 0 : i32
    %c0_i32_0 = arith.constant 0 : i32
    %c0_i32_1 = arith.constant 0 : i32
    return %arg0, %c0_i32, %c0_i32_0 : i32, i32, i32
  }
  func.func @transform_3(%arg0: i32) -> (i32, i32, i32) {
    %c0_i32 = arith.constant 0 : i32
    %c0_i32_0 = arith.constant 0 : i32
    %c0_i32_1 = arith.constant 0 : i32
    return %arg0, %c0_i32, %c0_i32_0 : i32, i32, i32
  }
}

</mosaic_0001>

<llo_original>
// kernel: _stacked_projection.1
$region0: #{_stacked_projection.1}
  #allocation0 [shape = 'u32[]', space=smem, size = 0x4, offset = 0x4, fixed_abs, tag = 'smem constant byte address 0x4 - core index']
  #allocation1 [shape = 'u32[144,128]{1,0:T(1,128)}', space=vmem, size = 0x12000, scoped, tag = 'internal scratch']
  %s0 = inlined_call_operand.vmem [shape: bf16[2,16,128], index: 0, kind: input, shape index: {}]
  %s1 = inlined_call_operand.hbm [shape: bf16[2,128,128], index: 1, kind: input, shape index: {}]
  %s2 = inlined_call_operand.vmem [shape: f32[2,1,128], index: 2, kind: input, shape index: {}]
  %s3 = inlined_call_operand.vmem [shape: f32[2,16,128], index: 3, kind: output, shape index: {}]
  %s4 = sld [smem:[#allocation0]]
  $region49: #{_stacked_projection.1} parent=0
    _
  %s6 = ssub.s32 1, %s4
  %s7 = scalar_select 0, %s6, %s4
  $region1: #{_stacked_projection.1} parent=0
    #allocation2 [shape = 'u8[65536]{0}', space=vmem, size = 0x10000, scoped, tag = 'input window, operand 1']
    #allocation3 [shape = 's32[2]{0}', space=sflag, size = 0x8, scoped, tag = 'scoped memory for _stacked_projection.1']
    %8 = vsyncpa [#allocation3], 0
    %s9 = scalar_lea.sflag [#allocation3], 1
    %10 = vsyncpa %s9, 0
    loop: start=0, step=1, limit=4
    $region2: #{_stacked_projection.1} parent=1 // loop_pre_header
      _
    $region3: #{_stacked_projection.1} parent=1 // loop_header
      %s12 = sphi 0, %s16
      %p13 = scmp.ge.s32.totalorder %s12, 4
      %s22 = sphi 0, %s24
      %s25 = sphi 0, %s22
      %s26 = sphi 0, %s25
      %s42 = sphi 0, %s26
      %s48 = sphi 0, %s50
      %s51 = sphi 0, %s48
      %s52 = sphi 0, %s51
      %s68 = sphi 0, %s52
      %s74 = sphi 0, %s76
      %s77 = sphi 0, %s74
      %s78 = sphi 0, %s77
      %s94 = sphi 0, %s78
      %s100 = sphi 0, %s102
      %s103 = sphi 0, %s100
      %s104 = sphi 0, %s103
      %s120 = sphi 0, %s104
    $region4: #{_stacked_projection.1} parent=1 // loop_header_branch
      %15 = sbr.rel (%p13) target = $region8
    $region5: #{_stacked_projection.1} parent=1 // loop_body
      %s17 = ssub.s32 %s12, 1
      %s18 = ssub.s32 %s12, 2
      %s19 = sadd.s32 %s12, 1
      %s20 = ssub.s32 %s12, %s19
      %p21 = scmp.eq.s32.totalorder %s20, 0
      %s23 = sadd.s32 %s22, 1
      %s24 = scalar_select %p21, %s22, %s23
      %p27 = pneg %p21
      %p28 = scmp.eq.s32.totalorder %s12, 1
      %p29 = por %p27, %p28
      %p30 = scmp.ne.s32.totalorder %s22, %s25
      %p31 = scmp.eq.s32.totalorder %s12, 0
      %p32 = por %p30, %p31
      %p33 = scmp.ne.s32.totalorder %s22, %s25
      %p34 = scmp.eq.s32.totalorder %s17, 1
      %p35 = por %p33, %p34
      %p36 = scmp.ne.s32.totalorder %s25, %s26
      %p37 = scmp.eq.s32.totalorder %s17, 0
      %p38 = por %p36, %p37
      %p39 = scmp.ne.s32.totalorder %s25, %s26
      %p40 = scmp.eq.s32.totalorder %s18, 1
      %p41 = por %p39, %p40
      %p43 = scmp.ne.s32.totalorder %s26, %s42
      %p44 = scmp.eq.s32.totalorder %s18, 0
      %p45 = por %p43, %p44
      %s46 = ssub.s32 %s12, %s19
      %p47 = scmp.eq.s32.totalorder %s46, 0
      %s49 = sadd.s32 %s48, 1
      %s50 = scalar_select %p47, %s48, %s49
      %p53 = pneg %p47
      %p54 = scmp.eq.s32.totalorder %s12, 1
      %p55 = por %p53, %p54
      %p56 = scmp.ne.s32.totalorder %s48, %s51
      %p57 = scmp.eq.s32.totalorder %s12, 0
      %p58 = por %p56, %p57
      %p59 = scmp.ne.s32.totalorder %s48, %s51
      %p60 = scmp.eq.s32.totalorder %s17, 1
      %p61 = por %p59, %p60
      %p62 = scmp.ne.s32.totalorder %s51, %s52
      %p63 = scmp.eq.s32.totalorder %s17, 0
      %p64 = por %p62, %p63
      %p65 = scmp.ne.s32.totalorder %s51, %s52
      %p66 = scmp.eq.s32.totalorder %s18, 1
      %p67 = por %p65, %p66
      %p69 = scmp.ne.s32.totalorder %s52, %s68
      %p70 = scmp.eq.s32.totalorder %s18, 0
      %p71 = por %p69, %p70
      %s72 = ssub.s32 %s12, %s19
      %p73 = scmp.eq.s32.totalorder %s72, 0
      %s75 = sadd.s32 %s74, 1
      %s76 = scalar_select %p73, %s74, %s75
      %p79 = pneg %p73
      %p80 = scmp.eq.s32.totalorder %s12, 1
      %p81 = por %p79, %p80
      %p82 = scmp.ne.s32.totalorder %s74, %s77
      %p83 = scmp.eq.s32.totalorder %s12, 0
      %p84 = por %p82, %p83
      %p85 = scmp.ne.s32.totalorder %s74, %s77
      %p86 = scmp.eq.s32.totalorder %s17, 1
      %p87 = por %p85, %p86
      %p88 = scmp.ne.s32.totalorder %s77, %s78
      %p89 = scmp.eq.s32.totalorder %s17, 0
      %p90 = por %p88, %p89
      %p91 = scmp.ne.s32.totalorder %s77, %s78
      %p92 = scmp.eq.s32.totalorder %s18, 1
      %p93 = por %p91, %p92
      %p95 = scmp.ne.s32.totalorder %s78, %s94
      %p96 = scmp.eq.s32.totalorder %s18, 0
      %p97 = por %p95, %p96
      %s98 = ssub.s32 %s12, %s19
      %p99 = scmp.eq.s32.totalorder %s98, 0
      %s101 = sadd.s32 %s100, 1
      %s102 = scalar_select %p99, %s100, %s101
      %p105 = pneg %p99
      %p106 = scmp.eq.s32.totalorder %s12, 1
      %p107 = por %p105, %p106
      %p108 = scmp.ne.s32.totalorder %s100, %s103
      %p109 = scmp.eq.s32.totalorder %s12, 0
      %p110 = por %p108, %p109
      %p111 = scmp.ne.s32.totalorder %s100, %s103
      %p112 = scmp.eq.s32.totalorder %s17, 1
      %p113 = por %p111, %p112
      %p114 = scmp.ne.s32.totalorder %s103, %s104
      %p115 = scmp.eq.s32.totalorder %s17, 0
      %p116 = por %p114, %p115
      %p117 = scmp.ne.s32.totalorder %s103, %s104
      %p118 = scmp.eq.s32.totalorder %s18, 1
      %p119 = por %p117, %p118
      %p121 = scmp.ne.s32.totalorder %s104, %s120
      %p122 = scmp.eq.s32.totalorder %s18, 0
      %p123 = por %p121, %p122
      %p124 = scmp.le.s32.totalorder 1, %s12
      %p125 = scmp.lt.s32.totalorder %s12, 3
      %p126 = pnand %p124, %p125
      %p127 = pneg %p126
      // Predicated region
      $region9: #{_stacked_projection.1} parent=5 // pred_check
        _
      $region10: #{_stacked_projection.1} parent=5 // pred_check_branch
        %129 = sbr.rel (%p126) target = $region12
      $region11: #{_stacked_projection.1} parent=5 // pred_region
        %s130 = ssub.s32 %s12, 1
      $region12: #{_stacked_projection.1} parent=5 // pred_fallthru
        _
      %p131 = scmp.lt.s32.totalorder %s12, 2
      // Predicated region
      $region13: #{_stacked_projection.1} parent=5 // pred_check
        %p132 = pneg %p131
      $region14: #{_stacked_projection.1} parent=5 // pred_check_branch
        %134 = sbr.rel (%p132) target = $region16
      $region15: #{_stacked_projection.1} parent=5 // pred_region
        // Predicated region
        $region17: #{_stacked_projection.1} parent=15 // pred_check
          %p135 = pneg %p32
        $region18: #{_stacked_projection.1} parent=15 // pred_check_branch
          %137 = sbr.rel (%p135) target = $region20
        $region19: #{_stacked_projection.1} parent=15 // pred_region
          %p138 = scmp.lt.s32.totalorder %s12, 1
          %s139 = scalar_select %p138, %s12, 1
          %s140 = smul.addr %s139, 2
          %s141 = smul.addr %s140, 4
          %s142 = scalar_lea.vmem %s0, %s141
        $region20: #{_stacked_projection.1} parent=15 // pred_fallthru
          _
        // Predicated region
        $region21: #{_stacked_projection.1} parent=15 // pred_check
          %p143 = pneg %p58
        $region22: #{_stacked_projection.1} parent=15 // pred_check_branch
          %145 = sbr.rel (%p143) target = $region24
        $region23: #{_stacked_projection.1} parent=15 // pred_region
          %s146 = sand.u32 %s48, 1
          %s147 = scalar_lea.sflag [#allocation3], %s146
          %s148 = sand.u32 %s48, 1
          %s149 = smul.addr %s148, 64
          %s150 = scalar_lea.vmem [#allocation2], %s149
          %s152 = ssub.s32 1024, 1024
          %153 = vsyncadd %s147, %s152
          %s154 = smul.addr %s12, 16
          %s155 = smul.addr %s154, 64
          %s156 = scalar_lea.hbm %s1, %s155
          %s157 = sshll.u32 %s150, 4
          %s158 = int_to_ptr.vmem [resolvable:$true] %s157
          %163 = dma.hbm_to_vmem [thread:$0]  %s156, 1024, %s158, %s147, 64, 64, 4
        $region24: #{_stacked_projection.1} parent=15 // pred_fallthru
          _
        // Predicated region
        $region25: #{_stacked_projection.1} parent=15 // pred_check
          %p164 = pneg %p84
        $region26: #{_stacked_projection.1} parent=15 // pred_check_branch
          %166 = sbr.rel (%p164) target = $region28
        $region27: #{_stacked_projection.1} parent=15 // pred_region
          %p167 = scmp.lt.s32.totalorder %s12, 1
          %s168 = scalar_select %p167, %s12, 1
          %s169 = scalar_lea.vmem %s2, %s168
        $region28: #{_stacked_projection.1} parent=15 // pred_fallthru
          _
      $region16: #{_stacked_projection.1} parent=5 // pred_fallthru
        _
      %p170 = scmp.le.s32.totalorder 1, %s12
      %p171 = scmp.lt.s32.totalorder %s12, 3
      %p172 = pnand %p170, %p171
      %p173 = pneg %p172
      // Predicated region
      $region29: #{_stacked_projection.1} parent=5 // pred_check
        _
      $region30: #{_stacked_projection.1} parent=5 // pred_check_branch
        %175 = sbr.rel (%p172) target = $region32
      $region31: #{_stacked_projection.1} parent=5 // pred_region
        %s176 = ssub.s32 %s12, 1
        %s177 = sand.u32 %s51, 1
        %s178 = scalar_lea.sflag [#allocation3], %s177
        %s179 = sand.u32 %s51, 1
        %s180 = smul.addr %s179, 64
        %s181 = scalar_lea.vmem [#allocation2], %s180
        // Predicated region
        $region33: #{_stacked_projection.1} parent=31 // pred_check
          %p182 = pneg %p64
        $region34: #{_stacked_projection.1} parent=31 // pred_check_branch
          %184 = sbr.rel (%p182) target = $region36
        $region35: #{_stacked_projection.1} parent=31 // pred_region
          %185 = dma.done %s178, 1024
        $region36: #{_stacked_projection.1} parent=31 // pred_fallthru
          _
        %p186 = scmp.lt.s32.totalorder %s17, 1
        %s187 = scalar_select %p186, %s17, 1
        %s188 = smul.addr %s187, 2
        %s189 = smul.addr %s188, 4
        %s190 = scalar_lea.vmem %s0, %s189
        %p191 = pneg %p38
        %p192 = pneg %p35
        %s193 = sand.u32 %s51, 1
        %s194 = scalar_lea.sflag [#allocation3], %s193
        %s195 = sand.u32 %s51, 1
        %s196 = smul.addr %s195, 64
        %s197 = scalar_lea.vmem [#allocation2], %s196
        %p198 = pneg %p64
        %p199 = pneg %p61
        %p200 = scmp.lt.s32.totalorder %s17, 1
        %s201 = scalar_select %p200, %s17, 1
        %s202 = scalar_lea.vmem %s2, %s201
        %p203 = pneg %p90
        %p204 = pneg %p87
        %p205 = pneg %p116
        %p206 = pneg %p113
        %p207 = scmp.lt.s32.totalorder %s17, 1
        %s208 = scalar_select %p207, %s17, 1
        %s209 = smul.addr %s208, 2
        %s210 = smul.addr %s209, 8
        %s211 = scalar_lea.vmem %s3, %s210
        %p212 = scmp.lt.s32.totalorder %s17, 1
        %s213 = scalar_select %p212, %s17, 1
        %s214 = smul.addr %s213, 2
        %s215 = smul.addr %s214, 4
        %s216 = scalar_lea.vmem %s0, %s215
        %p217 = scmp.lt.s32.totalorder %s17, 1
        %s218 = scalar_select %p217, %s17, 1
        %s219 = scalar_lea.vmem %s2, %s218
        %p220 = scmp.lt.s32.totalorder %s17, 1
        %s221 = scalar_select %p220, %s17, 1
        %s222 = smul.addr %s221, 2
        %s223 = smul.addr %s222, 8
        %s224 = scalar_lea.vmem %s3, %s223
        %v226 = vld [vmem:[%s216] sm:$0xf]
        %v227 = vld [vmem:[%s216 + $0x4] sm:$0xf]
        %v228 = vld [vmem:[%s181] sm:$0xf]
        %v229 = vld [vmem:[%s181 + $0x4] sm:$0xf]
        %v230 = vld [vmem:[%s181 + $0x8] sm:$0xf]
        %v231 = vld [vmem:[%s181 + $0xc] sm:$0xf]
        %v232 = vld [vmem:[%s181 + $0x10] sm:$0xf]
        %v233 = vld [vmem:[%s181 + $0x14] sm:$0xf]
        %v234 = vld [vmem:[%s181 + $0x18] sm:$0xf]
        %v235 = vld [vmem:[%s181 + $0x1c] sm:$0xf]
        %v236 = vld [vmem:[%s181 + $0x20] sm:$0xf]
        %v237 = vld [vmem:[%s181 + $0x24] sm:$0xf]
        %v238 = vld [vmem:[%s181 + $0x28] sm:$0xf]
        %v239 = vld [vmem:[%s181 + $0x2c] sm:$0xf]
        %v240 = vld [vmem:[%s181 + $0x30] sm:$0xf]
        %v241 = vld [vmem:[%s181 + $0x34] sm:$0xf]
        %v242 = vld [vmem:[%s181 + $0x38] sm:$0xf]
        %v243 = vld [vmem:[%s181 + $0x3c] sm:$0xf]
        %v244 = vld [vmem:[%s219] sm:$0x1]
        %v246 = vlaneseq
        %v247 = vshrl.u32 %v246, 7
        %v248 = vsub.s32 0, %v247
        %v249 = vrot.slane %v244, %v248
        %v253 = vunpack.c.l.b16 %v226
        %v254 = vunpack.c.l.b16 %v227
        %v255 = vpack.c.b16 %v254, %v253
        %v273 = vunpack.c.l.b16 %v228
        %v274 = vunpack.c.l.b16 %v229
        %v275 = vunpack.c.l.b16 %v230
        %v276 = vunpack.c.l.b16 %v231
        %v277 = vunpack.c.l.b16 %v232
        %v278 = vunpack.c.l.b16 %v233
        %v279 = vunpack.c.l.b16 %v234
        %v280 = vunpack.c.l.b16 %v235
        %v281 = vunpack.c.l.b16 %v236
        %v282 = vunpack.c.l.b16 %v237
        %v283 = vunpack.c.l.b16 %v238
        %v284 = vunpack.c.l.b16 %v239
        %v285 = vunpack.c.l.b16 %v240
        %v286 = vunpack.c.l.b16 %v241
        %v287 = vunpack.c.l.b16 %v242
        %v288 = vunpack.c.l.b16 %v243
        %v289 = vpack.c.b16 %v274, %v273
        %v290 = vpack.c.b16 %v276, %v275
        %v291 = vpack.c.b16 %v278, %v277
        %v292 = vpack.c.b16 %v280, %v279
        %v293 = vpack.c.b16 %v282, %v281
        %v294 = vpack.c.b16 %v284, %v283
        %v295 = vpack.c.b16 %v286, %v285
        %v296 = vpack.c.b16 %v288, %v287
        %305 = vmatprep.subr.bf16.mxu0 0
        %306 = vmatpush1.bf16.msra.mxu0 %v289
        %307 = vmatprep.subr.bf16.mxu0 0
        %308 = vmatpush1.bf16.msra.mxu0 %v290
        %309 = vmatprep.subr.bf16.mxu0 0
        %310 = vmatpush1.bf16.msra.mxu0 %v291
        %311 = vmatprep.subr.bf16.mxu0 0
        %312 = vmatpush1.bf16.msra.mxu0 %v292
        %313 = vmatprep.subr.bf16.mxu0 0
        %314 = vmatpush1.bf16.msra.mxu0 %v293
        %315 = vmatprep.subr.bf16.mxu0 0
        %316 = vmatpush1.bf16.msra.mxu0 %v294
        %317 = vmatprep.subr.bf16.mxu0 0
        %318 = vmatpush1.bf16.msra.mxu0 %v295
        %319 = vmatprep.subr.bf16.mxu0 0
        %320 = vmatpush1.bf16.msra.mxu0 %v296
        %321 = vmatprep.subr.bf16.mxu0 0
        %322 = vmatpush1.bf16.msra.mxu0 0
        %323 = vmatprep.subr.bf16.mxu0 0
        %324 = vmatpush1.bf16.msra.mxu0 0
        %325 = vmatprep.subr.bf16.mxu0 0
        %326 = vmatpush1.bf16.msra.mxu0 0
        %327 = vmatprep.subr.bf16.mxu0 0
        %328 = vmatpush1.bf16.msra.mxu0 0
        %329 = vmatprep.subr.bf16.mxu0 0
        %330 = vmatpush1.bf16.msra.mxu0 0
        %331 = vmatprep.subr.bf16.mxu0 0
        %332 = vmatpush1.bf16.msra.mxu0 0
        %333 = vmatprep.subr.bf16.mxu0 0
        %334 = vmatpush1.bf16.msra.mxu0 0
        %335 = vmatprep.subr.bf16.mxu0 0
        %336 = vmatpush1.bf16.msra.mxu0 0
        %337 = vmatprep.mubr.bf16.mxu0 0
        %338 = vmatmul.mubr.bf16.gmra.mrb[0].mxu0 %v255
        %v339 = vpop.f32.mrb[0].mxu0
        %v340 = vadd.f32 %v249, %v339
        %v341 = vpop.f32.mrb[0].mxu0
        %v342 = vpop.f32.mrb[0].mxu0
        %v343 = vadd.f32 %v249, %v342
        %v344 = vpop.f32.mrb[0].mxu0
        %345 = vdwg.mxu0
        %v346 = vmax.f32 %v340, 0.0
        %v347 = vmax.f32 %v343, 0.0
        %348 = vst [vmem:[%s224] sm:$0xff] %v346
        %349 = vst [vmem:[%s224 + $0x8] sm:$0xff] %v347
        %p350 = scmp.lt.s32.totalorder %s17, 1
        %s351 = scalar_select %p350, %s17, 1
        %s352 = smul.addr %s351, 2
        %s353 = smul.addr %s352, 8
        %s354 = scalar_lea.vmem %s3, %s353
        // Predicated region
        $region37: #{_stacked_projection.1} parent=31 // pred_check
          %p355 = pneg %p113
        $region38: #{_stacked_projection.1} parent=31 // pred_check_branch
          %357 = sbr.rel (%p355) target = $region40
        $region39: #{_stacked_projection.1} parent=31 // pred_region
          _
        $region40: #{_stacked_projection.1} parent=31 // pred_fallthru
          _
      $region32: #{_stacked_projection.1} parent=5 // pred_fallthru
        _
      %p358 = scmp.le.s32.totalorder 2, %s12
      // Predicated region
      $region41: #{_stacked_projection.1} parent=5 // pred_check
        %p359 = pneg %p358
      $region42: #{_stacked_projection.1} parent=5 // pred_check_branch
        %361 = sbr.rel (%p359) target = $region44
      $region43: #{_stacked_projection.1} parent=5 // pred_region
        %s362 = ssub.s32 %s12, 2
        // Predicated region
        $region45: #{_stacked_projection.1} parent=43 // pred_check
          %p363 = pneg %p119
        $region46: #{_stacked_projection.1} parent=43 // pred_check_branch
          %365 = sbr.rel (%p363) target = $region48
        $region47: #{_stacked_projection.1} parent=43 // pred_region
          %p366 = scmp.lt.s32.totalorder %s18, 1
          %s367 = scalar_select %p366, %s18, 1
          %s368 = smul.addr %s367, 2
          %s369 = smul.addr %s368, 8
          %s370 = scalar_lea.vmem %s3, %s369
        $region48: #{_stacked_projection.1} parent=43 // pred_fallthru
          _
      $region44: #{_stacked_projection.1} parent=5 // pred_fallthru
        _
    $region6: #{_stacked_projection.1} parent=1 // loop_footer
      %s16 = sadd.s32 1, %s12
    $region7: #{_stacked_projection.1} parent=1 // loop_footer_branch
      %11 = sbr.rel target = $region3
    $region8: #{_stacked_projection.1} parent=1 // loop_exit
      _
    %371 = vsyncpa [#allocation3], 1
    %s372 = scalar_lea.sflag [#allocation3], 1
    %373 = vsyncpa %s372, 1

</llo_original>
